<compile_context>
chip_gen: v7x
topology: tpu7x:2x2x1
jax: 0.10.0
libtpu: 0.0.40
codegen_flags: <defaults>
</compile_context>

<pallas_src>
import functools

import jax
import jax.numpy as jnp
from jax.experimental import pallas as pl
from jax.experimental.pallas import tpu as pltpu

OBS_DIM = 16          # raw observation dim (backend input)
INPUT_DIM = 32        # backend output dim == C51DQN input_dim
NUM_ACTIONS = 4       # output_dim_adv
OUTPUT_DIM_VALUE = 1  # output_dim_value (default)
NUM_ATOMS = 51        # num_atoms (default)
V_MIN, V_MAX = 0.0, 200.0

ATOM_PAD = 128                        # pad each atom block to a full 128-lane vreg group
HEAD_BLOCKS = NUM_ACTIONS             # dueling combine folded in -> one block per action
HEAD_WIDTH = HEAD_BLOCKS * ATOM_PAD   # 512 (lane-dense, multiple of 128)
NEG_PAD = -1e9                        # bias on padded atom lanes -> exp() == 0 in softmax


def c51_kernel(obs_ref, wb_ref, bb_ref, wh_ref, bh_ref, sup_ref, q_ref,
               dist_ref, *, num_actions, atom_pad):
    # ---- backend: Linear + ReLU (bf16 operands, f32 accumulation) ---------
    obs = obs_ref[...].astype(jnp.bfloat16)                      # in-kernel cast (free)
    feat = jnp.dot(obs, wb_ref[...], preferred_element_type=jnp.float32)
    feat = jnp.maximum(feat + bb_ref[...], 0.0)                  # (B, 32) f32

    # ---- fused head with the dueling combine folded into the weights ------
    # column block a of wh/bh already encodes  Wv + Wa_a - mean_a(Wa)  and
    # bv + ba_a - mean(ba); padded atom lanes carry a -1e9 bias.
    head = jnp.dot(feat.astype(jnp.bfloat16), wh_ref[...],
                   preferred_element_type=jnp.float32) + bh_ref[...]  # (B, 512)

    for a in range(num_actions):     # A is small -> fully unrolled
        q_atoms = head[:, a * atom_pad:(a + 1) * atom_pad]       # 128-aligned slice
        # stabilized softmax over atoms; padded lanes sit at ~-1e9 -> exp == 0
        q_atoms = q_atoms - jnp.max(q_atoms, axis=-1, keepdims=True)
        e = jnp.exp(q_atoms)
        inv = pl.reciprocal(jnp.sum(e, axis=-1, keepdims=True), approx=True)
        # .clamp(min=0.001) without renormalization, matching PyTorch.
        # (Padded lanes clamp to 0.001 too, but the support selector has zero
        #  rows there so they contribute nothing to q.)
        dist_ref[:, a * atom_pad:(a + 1) * atom_pad] = jnp.maximum(e * inv, 0.001)

    # ---- expectation for ALL actions as one matmul vs block-diag support --
    q_ref[...] = jnp.dot(dist_ref[...], sup_ref[...],
                         preferred_element_type=jnp.float32)     # (B, A), one store


def _pick_batch_tile(B):
    """Batch tile: big on single-TC chips, >=2 grid steps on dual-TC (v7x)."""
    cap = 1024
    if B > cap:
        return cap                              # >= 2 steps automatically
    if B >= 512:
        # split a sizable batch into 2 parallel steps so both v7x cores work
        half = -(-B // 2)
        return ((half + 7) // 8) * 8            # keep sublane (8) alignment
    return B                                    # small batch: single step


def c51_forward(obs, packed):
    wb, bb, wh, bh, sup = packed
    B = obs.shape[0]

    b_tile = _pick_batch_tile(B)
    num_tiles = pl.cdiv(B, b_tile)
    b_pad = num_tiles * b_tile
    if b_pad != B:
        obs = jnp.pad(obs, ((0, b_pad - B), (0, 0)))   # masked-tail via zero pad

    kernel = functools.partial(c51_kernel,
                               num_actions=NUM_ACTIONS,
                               atom_pad=ATOM_PAD)

    const2 = lambda i: (0, 0)
    in_specs = [
        pl.BlockSpec((b_tile, OBS_DIM), lambda i: (i, 0)),   # obs (batch-tiled, f32)
        pl.BlockSpec(wb.shape, const2),                      # backend weight (bf16)
        pl.BlockSpec(bb.shape, const2),                      # backend bias (f32)
        pl.BlockSpec(wh.shape, const2),                      # folded head weight (bf16)
        pl.BlockSpec(bh.shape, const2),                      # folded head bias (f32)
        pl.BlockSpec(sup.shape, const2),                     # block-diag support (f32)
    ]
    out_spec = pl.BlockSpec((b_tile, NUM_ACTIONS), lambda i: (i, 0))

    out = pl.pallas_call(
        kernel,
        out_shape=jax.ShapeDtypeStruct((b_pad, NUM_ACTIONS), jnp.float32),
        grid_spec=pltpu.PrefetchScalarGridSpec(
            num_scalar_prefetch=0,
            grid=(num_tiles,),
            in_specs=in_specs,
            out_specs=out_spec,
            scratch_shapes=[
                pltpu.VMEM((b_tile, NUM_ACTIONS * ATOM_PAD), jnp.float32),
            ],
        ),
        compiler_params=pltpu.CompilerParams(
            dimension_semantics=("parallel",)),
    )(obs, wb, bb, wh, bh, sup)

    return out[:B] if b_pad != B else out


def make_params(key):
    """Deterministic synthetic parameters in the PyTorch layout (f32)."""
    ks = jax.random.split(key, 6)
    scale = 0.1
    wb = scale * jax.random.normal(ks[0], (OBS_DIM, INPUT_DIM), jnp.float32)
    bb = scale * jax.random.normal(ks[1], (1, INPUT_DIM), jnp.float32)
    wa = scale * jax.random.normal(
        ks[2], (INPUT_DIM, NUM_ACTIONS * NUM_ATOMS), jnp.float32)
    ba = scale * jax.random.normal(ks[3], (1, NUM_ACTIONS * NUM_ATOMS), jnp.float32)
    wv = scale * jax.random.normal(
        ks[4], (INPUT_DIM, OUTPUT_DIM_VALUE * NUM_ATOMS), jnp.float32)
    bv = scale * jax.random.normal(ks[5], (1, OUTPUT_DIM_VALUE * NUM_ATOMS),
                                   jnp.float32)
    # register_buffer('support', torch.linspace(v_min, v_max, num_atoms))
    support = jnp.linspace(V_MIN, V_MAX, NUM_ATOMS,
                           dtype=jnp.float32).reshape(1, NUM_ATOMS)
    return wb, bb, wa, ba, wv, bv, support


def pack_params(params):
    """Build the fused / folded / padded / bf16 kernel operands."""
    wb, bb, wa, ba, wv, bv, support = params

    wa3 = wa.reshape(INPUT_DIM, NUM_ACTIONS, NUM_ATOMS)
    ba3 = ba.reshape(NUM_ACTIONS, NUM_ATOMS)
    wa_mean = wa3.mean(axis=1)                      # (INPUT_DIM, NUM_ATOMS)
    ba_mean = ba3.mean(axis=0)                      # (NUM_ATOMS,)

    wh = jnp.zeros((INPUT_DIM, HEAD_WIDTH), jnp.float32)
    bh = jnp.zeros((HEAD_WIDTH,), jnp.float32)

    # Per-action block with the dueling combine folded in:
    #   W'_a = Wv + Wa_a - mean_a(Wa),  b'_a = bv + ba_a - mean(ba)
    # Padded atom lanes get a -1e9 bias so they vanish in the softmax.
    for a in range(NUM_ACTIONS):
        off = a * ATOM_PAD
        wh = wh.at[:, off:off + NUM_ATOMS].set(wv + wa3[:, a, :] - wa_mean)
        bh = bh.at[off:off + NUM_ATOMS].set(bv[0] + ba3[a] - ba_mean)
        bh = bh.at[off + NUM_ATOMS:off + ATOM_PAD].set(NEG_PAD)

    # Block-diagonal support selector: (A*128, A); zero rows on padded lanes.
    sup = jnp.zeros((NUM_ACTIONS * ATOM_PAD, NUM_ACTIONS), jnp.float32)
    for a in range(NUM_ACTIONS):
        sup = sup.at[a * ATOM_PAD:a * ATOM_PAD + NUM_ATOMS, a].set(support[0])

    return (wb.astype(jnp.bfloat16), bb,
            wh.astype(jnp.bfloat16), bh.reshape(1, HEAD_WIDTH), sup)


def c51_reference(obs, params):
    """Pure-JAX f32 reference mirroring the PyTorch forward, for validation."""
    wb, bb, wa, ba, wv, bv, support = params
    feat = jnp.maximum(obs @ wb + bb, 0.0)
    o_adv = (feat @ wa + ba).reshape(-1, NUM_ACTIONS, NUM_ATOMS)
    o_val = (feat @ wv + bv).reshape(-1, OUTPUT_DIM_VALUE, NUM_ATOMS)
    q_atoms = o_val + o_adv - o_adv.mean(axis=-2, keepdims=True)
    dist = jax.nn.softmax(q_atoms, axis=-1)
    dist = jnp.clip(dist, 0.001, None)
    return jnp.sum(dist * support.reshape(1, 1, NUM_ATOMS), axis=2)


if __name__ == "__main__":
    key = jax.random.PRNGKey(0)
    k_obs, k_par = jax.random.split(key)

    B = 8
    obs = jax.random.normal(k_obs, (B, OBS_DIM), jnp.float32)
    params = make_params(k_par)
    packed = pack_params(params)

    q = c51_forward(obs, packed)
    q = jax.block_until_ready(q)

    q_ref = c51_reference(obs, params)
    assert q.shape == (B, NUM_ACTIONS)
    # Tolerance is looser than bit-exact: backend/head matmul operands are
    # bf16 and the softmax denominator uses the EUP approximate reciprocal
    # (intentional, documented deviations); q is O(100) so this is still a
    # tight relative check.
    assert jnp.allclose(q, q_ref, rtol=1e-2, atol=1e-2), (
        f"max abs err {jnp.max(jnp.abs(q - q_ref))}")

    print("KERNEL_OK")
</pallas_src>

<mosaic_0001>
module attributes {stable_mosaic.version = 11 : i64} {
  func.func @c51_kernel(%arg0: i32, %arg1: memref<8x16xf32, #tpu.memory_space<vmem>>, %arg2: memref<16x32xbf16, #tpu.memory_space<vmem>>, %arg3: memref<1x32xf32, #tpu.memory_space<vmem>>, %arg4: memref<32x512xbf16, #tpu.memory_space<vmem>>, %arg5: memref<1x512xf32, #tpu.memory_space<vmem>>, %arg6: memref<512x4xf32, #tpu.memory_space<vmem>>, %arg7: memref<8x4xf32, #tpu.memory_space<vmem>>, %arg8: memref<8x512xf32, #tpu.memory_space<vmem>>) attributes {dimension_semantics = [#tpu.dimension_semantics<parallel>], iteration_bounds = array<i64: 1>, scalar_prefetch = 0 : i64, scratch_operands = 1 : i64, tpu.core_type = #tpu.core_type<tc>, window_params = [{transform_indices = @transform_0, window_bounds = array<i64: 8, 16>}, {pipeline_mode = #tpu.pipeline_mode<synchronous>, transform_indices = @transform_1, window_bounds = array<i64: 16, 32>}, {pipeline_mode = #tpu.pipeline_mode<synchronous>, transform_indices = @transform_2, window_bounds = array<i64: 1, 32>}, {pipeline_mode = #tpu.pipeline_mode<synchronous>, transform_indices = @transform_3, window_bounds = array<i64: 32, 512>}, {pipeline_mode = #tpu.pipeline_mode<synchronous>, transform_indices = @transform_4, window_bounds = array<i64: 1, 512>}, {pipeline_mode = #tpu.pipeline_mode<synchronous>, transform_indices = @transform_5, window_bounds = array<i64: 512, 4>}, {transform_indices = @transform_6, window_bounds = array<i64: 8, 4>}]} {
    %c0 = arith.constant 0 : index
    %c0_0 = arith.constant 0 : index
    %0 = vector.load %arg1[%c0, %c0_0] : memref<8x16xf32, #tpu.memory_space<vmem>>, vector<8x16xf32>
    %1 = arith.truncf %0 : vector<8x16xf32> to vector<8x16xbf16>
    %c0_1 = arith.constant 0 : index
    %c0_2 = arith.constant 0 : index
    %2 = vector.load %arg2[%c0_1, %c0_2] : memref<16x32xbf16, #tpu.memory_space<vmem>>, vector<16x32xbf16>
    %cst = arith.constant dense<0.000000e+00> : vector<8x32xf32>
    %3 = tpu.matmul %1, %2, %cst {dimension_numbers = #tpu.dot_dimension_numbers<[1], [0], [0], [1], [0, 0, 1, 1], [], []>} : vector<8x16xbf16>, vector<16x32xbf16>, vector<8x32xf32> -> vector<8x32xf32>
    %c0_3 = arith.constant 0 : index
    %c0_4 = arith.constant 0 : index
    %4 = vector.load %arg3[%c0_3, %c0_4] : memref<1x32xf32, #tpu.memory_space<vmem>>, vector<1x32xf32>
    %5 = vector.broadcast %4 : vector<1x32xf32> to vector<8x32xf32>
    %6 = arith.addf %3, %5 : vector<8x32xf32>
    %cst_5 = arith.constant 0.000000e+00 : f32
    %7 = vector.broadcast %cst_5 : f32 to vector<8x32xf32>
    %8 = arith.maximumf %6, %7 : vector<8x32xf32>
    %9 = arith.truncf %8 : vector<8x32xf32> to vector<8x32xbf16>
    %c0_6 = arith.constant 0 : index
    %c0_7 = arith.constant 0 : index
    %10 = vector.load %arg4[%c0_6, %c0_7] : memref<32x512xbf16, #tpu.memory_space<vmem>>, vector<32x512xbf16>
    %cst_8 = arith.constant dense<0.000000e+00> : vector<8x512xf32>
    %11 = tpu.matmul %9, %10, %cst_8 {dimension_numbers = #tpu.dot_dimension_numbers<[1], [0], [0], [1], [0, 0, 1, 1], [], []>} : vector<8x32xbf16>, vector<32x512xbf16>, vector<8x512xf32> -> vector<8x512xf32>
    %c0_9 = arith.constant 0 : index
    %c0_10 = arith.constant 0 : index
    %12 = vector.load %arg5[%c0_9, %c0_10] : memref<1x512xf32, #tpu.memory_space<vmem>>, vector<1x512xf32>
    %13 = vector.broadcast %12 : vector<1x512xf32> to vector<8x512xf32>
    %14 = arith.addf %11, %13 : vector<8x512xf32>
    %15 = vector.extract_strided_slice %14 {offsets = [0, 0], sizes = [8, 128], strides = [1, 1]} : vector<8x512xf32> to vector<8x128xf32>
    %cst_11 = arith.constant dense<0xFF800000> : vector<8xf32>
    %16 = vector.multi_reduction <maximumf>, %15, %cst_11 [1] : vector<8x128xf32> to vector<8xf32>
    %17 = vector.shape_cast %16 : vector<8xf32> to vector<8x1xf32>
    %18 = vector.broadcast %17 : vector<8x1xf32> to vector<8x128xf32>
    %19 = arith.subf %15, %18 : vector<8x128xf32>
    %20 = math.exp %19 : vector<8x128xf32>
    %cst_12 = arith.constant dense<0.000000e+00> : vector<8xf32>
    %21 = vector.multi_reduction <add>, %20, %cst_12 [1] : vector<8x128xf32> to vector<8xf32>
    %22 = vector.shape_cast %21 : vector<8xf32> to vector<8x1xf32>
    %23 = tpu.reciprocal %22 {approx = true} : vector<8x1xf32> -> vector<8x1xf32>
    %24 = vector.broadcast %23 : vector<8x1xf32> to vector<8x128xf32>
    %25 = arith.mulf %20, %24 : vector<8x128xf32>
    %cst_13 = arith.constant 1.000000e-03 : f32
    %26 = vector.broadcast %cst_13 : f32 to vector<8x128xf32>
    %27 = arith.maximumf %25, %26 : vector<8x128xf32>
    %c0_14 = arith.constant 0 : index
    %c0_15 = arith.constant 0 : index
    %28 = vector.load %arg8[%c0_14, %c0_15] : memref<8x512xf32, #tpu.memory_space<vmem>>, vector<8x128xf32>
    tpu.vector_store %arg8[%c0_14, %c0_15], %27 {strides = array<i32>} : memref<8x512xf32, #tpu.memory_space<vmem>>, vector<8x128xf32>,
    %29 = vector.extract_strided_slice %14 {offsets = [0, 128], sizes = [8, 128], strides = [1, 1]} : vector<8x512xf32> to vector<8x128xf32>
    %cst_16 = arith.constant dense<0xFF800000> : vector<8xf32>
    %30 = vector.multi_reduction <maximumf>, %29, %cst_16 [1] : vector<8x128xf32> to vector<8xf32>
    %31 = vector.shape_cast %30 : vector<8xf32> to vector<8x1xf32>
    %32 = vector.broadcast %31 : vector<8x1xf32> to vector<8x128xf32>
    %33 = arith.subf %29, %32 : vector<8x128xf32>
    %34 = math.exp %33 : vector<8x128xf32>
    %cst_17 = arith.constant dense<0.000000e+00> : vector<8xf32>
    %35 = vector.multi_reduction <add>, %34, %cst_17 [1] : vector<8x128xf32> to vector<8xf32>
    %36 = vector.shape_cast %35 : vector<8xf32> to vector<8x1xf32>
    %37 = tpu.reciprocal %36 {approx = true} : vector<8x1xf32> -> vector<8x1xf32>
    %38 = vector.broadcast %37 : vector<8x1xf32> to vector<8x128xf32>
    %39 = arith.mulf %34, %38 : vector<8x128xf32>
    %cst_18 = arith.constant 1.000000e-03 : f32
    %40 = vector.broadcast %cst_18 : f32 to vector<8x128xf32>
    %41 = arith.maximumf %39, %40 : vector<8x128xf32>
    %c0_19 = arith.constant 0 : index
    %c128 = arith.constant 128 : index
    %42 = vector.load %arg8[%c0_19, %c128] : memref<8x512xf32, #tpu.memory_space<vmem>>, vector<8x128xf32>
    tpu.vector_store %arg8[%c0_19, %c128], %41 {strides = array<i32>} : memref<8x512xf32, #tpu.memory_space<vmem>>, vector<8x128xf32>,
    %43 = vector.extract_strided_slice %14 {offsets = [0, 256], sizes = [8, 128], strides = [1, 1]} : vector<8x512xf32> to vector<8x128xf32>
    %cst_20 = arith.constant dense<0xFF800000> : vector<8xf32>
    %44 = vector.multi_reduction <maximumf>, %43, %cst_20 [1] : vector<8x128xf32> to vector<8xf32>
    %45 = vector.shape_cast %44 : vector<8xf32> to vector<8x1xf32>
    %46 = vector.broadcast %45 : vector<8x1xf32> to vector<8x128xf32>
    %47 = arith.subf %43, %46 : vector<8x128xf32>
    %48 = math.exp %47 : vector<8x128xf32>
    %cst_21 = arith.constant dense<0.000000e+00> : vector<8xf32>
    %49 = vector.multi_reduction <add>, %48, %cst_21 [1] : vector<8x128xf32> to vector<8xf32>
    %50 = vector.shape_cast %49 : vector<8xf32> to vector<8x1xf32>
    %51 = tpu.reciprocal %50 {approx = true} : vector<8x1xf32> -> vector<8x1xf32>
    %52 = vector.broadcast %51 : vector<8x1xf32> to vector<8x128xf32>
    %53 = arith.mulf %48, %52 : vector<8x128xf32>
    %cst_22 = arith.constant 1.000000e-03 : f32
    %54 = vector.broadcast %cst_22 : f32 to vector<8x128xf32>
    %55 = arith.maximumf %53, %54 : vector<8x128xf32>
    %c0_23 = arith.constant 0 : index
    %c256 = arith.constant 256 : index
    %56 = vector.load %arg8[%c0_23, %c256] : memref<8x512xf32, #tpu.memory_space<vmem>>, vector<8x128xf32>
    tpu.vector_store %arg8[%c0_23, %c256], %55 {strides = array<i32>} : memref<8x512xf32, #tpu.memory_space<vmem>>, vector<8x128xf32>,
    %57 = vector.extract_strided_slice %14 {offsets = [0, 384], sizes = [8, 128], strides = [1, 1]} : vector<8x512xf32> to vector<8x128xf32>
    %cst_24 = arith.constant dense<0xFF800000> : vector<8xf32>
    %58 = vector.multi_reduction <maximumf>, %57, %cst_24 [1] : vector<8x128xf32> to vector<8xf32>
    %59 = vector.shape_cast %58 : vector<8xf32> to vector<8x1xf32>
    %60 = vector.broadcast %59 : vector<8x1xf32> to vector<8x128xf32>
    %61 = arith.subf %57, %60 : vector<8x128xf32>
    %62 = math.exp %61 : vector<8x128xf32>
    %cst_25 = arith.constant dense<0.000000e+00> : vector<8xf32>
    %63 = vector.multi_reduction <add>, %62, %cst_25 [1] : vector<8x128xf32> to vector<8xf32>
    %64 = vector.shape_cast %63 : vector<8xf32> to vector<8x1xf32>
    %65 = tpu.reciprocal %64 {approx = true} : vector<8x1xf32> -> vector<8x1xf32>
    %66 = vector.broadcast %65 : vector<8x1xf32> to vector<8x128xf32>
    %67 = arith.mulf %62, %66 : vector<8x128xf32>
    %cst_26 = arith.constant 1.000000e-03 : f32
    %68 = vector.broadcast %cst_26 : f32 to vector<8x128xf32>
    %69 = arith.maximumf %67, %68 : vector<8x128xf32>
    %c0_27 = arith.constant 0 : index
    %c384 = arith.constant 384 : index
    %70 = vector.load %arg8[%c0_27, %c384] : memref<8x512xf32, #tpu.memory_space<vmem>>, vector<8x128xf32>
    tpu.vector_store %arg8[%c0_27, %c384], %69 {strides = array<i32>} : memref<8x512xf32, #tpu.memory_space<vmem>>, vector<8x128xf32>,
    %c0_28 = arith.constant 0 : index
    %c0_29 = arith.constant 0 : index
    %71 = vector.load %arg8[%c0_28, %c0_29] : memref<8x512xf32, #tpu.memory_space<vmem>>, vector<8x512xf32>
    %c0_30 = arith.constant 0 : index
    %c0_31 = arith.constant 0 : index
    %72 = vector.load %arg6[%c0_30, %c0_31] : memref<512x4xf32, #tpu.memory_space<vmem>>, vector<512x4xf32>
    %cst_32 = arith.constant dense<0.000000e+00> : vector<8x4xf32>
    %73 = tpu.matmul %71, %72, %cst_32 {dimension_numbers = #tpu.dot_dimension_numbers<[1], [0], [0], [1], [0, 0, 1, 1], [], []>} : vector<8x512xf32>, vector<512x4xf32>, vector<8x4xf32> -> vector<8x4xf32>
    %c0_33 = arith.constant 0 : index
    %c0_34 = arith.constant 0 : index
    %74 = vector.load %arg7[%c0_33, %c0_34] : memref<8x4xf32, #tpu.memory_space<vmem>>, vector<8x4xf32>
    tpu.vector_store %arg7[%c0_33, %c0_34], %73 {strides = array<i32>} : memref<8x4xf32, #tpu.memory_space<vmem>>, vector<8x4xf32>,
    return
  }
  func.func @transform_0(%arg0: i32) -> (i32, i32) {
    %c0_i32 = arith.constant 0 : i32
    %c0_i32_0 = arith.constant 0 : i32
    return %arg0, %c0_i32 : i32, i32
  }
  func.func @transform_1(%arg0: i32) -> (i32, i32) {
    %c0_i32 = arith.constant 0 : i32
    %c0_i32_0 = arith.constant 0 : i32
    %c0_i32_1 = arith.constant 0 : i32
    return %c0_i32, %c0_i32_0 : i32, i32
  }
  func.func @transform_2(%arg0: i32) -> (i32, i32) {
    %c0_i32 = arith.constant 0 : i32
    %c0_i32_0 = arith.constant 0 : i32
    %c0_i32_1 = arith.constant 0 : i32
    return %c0_i32, %c0_i32_0 : i32, i32
  }
  func.func @transform_3(%arg0: i32) -> (i32, i32) {
    %c0_i32 = arith.constant 0 : i32
    %c0_i32_0 = arith.constant 0 : i32
    %c0_i32_1 = arith.constant 0 : i32
    return %c0_i32, %c0_i32_0 : i32, i32
  }
  func.func @transform_4(%arg0: i32) -> (i32, i32) {
    %c0_i32 = arith.constant 0 : i32
    %c0_i32_0 = arith.constant 0 : i32
    %c0_i32_1 = arith.constant 0 : i32
    return %c0_i32, %c0_i32_0 : i32, i32
  }
  func.func @transform_5(%arg0: i32) -> (i32, i32) {
    %c0_i32 = arith.constant 0 : i32
    %c0_i32_0 = arith.constant 0 : i32
    %c0_i32_1 = arith.constant 0 : i32
    return %c0_i32, %c0_i32_0 : i32, i32
  }
  func.func @transform_6(%arg0: i32) -> (i32, i32) {
    %c0_i32 = arith.constant 0 : i32
    %c0_i32_0 = arith.constant 0 : i32
    return %arg0, %c0_i32 : i32, i32
  }
}

</mosaic_0001>

<llo_original>
// kernel: tpu_custom_call.1
$region0: #{tpu_custom_call.1}
  #allocation0 [shape = 'u32[]', space=smem, size = 0x4, offset = 0x4, fixed_abs, tag = 'smem constant byte address 0x4 - core index']
  #allocation1 [shape = 'u32[144,128]{1,0:T(1,128)}', space=vmem, size = 0x12000, scoped, tag = 'internal scratch']
  #allocation2 [shape = 'f32[8,512]{1,0:T(8,128)}', space=vmem, size = 0x4000, scoped, tag = 'scratch operand']
  %s0 = inlined_call_operand.vmem [shape: f32[8,16], index: 0, kind: input, shape index: {}]
  %s1 = inlined_call_operand.vmem [shape: bf16[16,32], index: 1, kind: input, shape index: {}]
  %s2 = inlined_call_operand.vmem [shape: f32[1,32], index: 2, kind: input, shape index: {}]
  %s3 = inlined_call_operand.vmem [shape: bf16[32,512], index: 3, kind: input, shape index: {}]
  %s4 = inlined_call_operand.vmem [shape: f32[1,512], index: 4, kind: input, shape index: {}]
  %s5 = inlined_call_operand.vmem [shape: f32[512,4], index: 5, kind: input, shape index: {}]
  %s6 = inlined_call_operand.vmem [shape: f32[8,4], index: 6, kind: output, shape index: {}]
  %s7 = sld [smem:[#allocation0]]
  $region34: #{tpu_custom_call.1} parent=0
    _
  %s9 = ssub.s32 1, %s7
  %s10 = scalar_select 0, %s9, %s7
  // Predicated region
  $region2: #{tpu_custom_call.1} parent=0 // pred_check
    _
  $region3: #{tpu_custom_call.1} parent=0 // pred_check_branch
    %12 = sbr.rel (0) target = $region5
  $region4: #{tpu_custom_call.1} parent=0 // pred_region
    _
  $region5: #{tpu_custom_call.1} parent=0 // pred_fallthru
    _
  // Predicated region
  $region6: #{tpu_custom_call.1} parent=0 // pred_check
    _
  $region7: #{tpu_custom_call.1} parent=0 // pred_check_branch
    %14 = sbr.rel (0) target = $region9
  $region8: #{tpu_custom_call.1} parent=0 // pred_region
    _
  $region9: #{tpu_custom_call.1} parent=0 // pred_fallthru
    _
  // Predicated region
  $region10: #{tpu_custom_call.1} parent=0 // pred_check
    _
  $region11: #{tpu_custom_call.1} parent=0 // pred_check_branch
    %16 = sbr.rel (0) target = $region13
  $region12: #{tpu_custom_call.1} parent=0 // pred_region
    _
  $region13: #{tpu_custom_call.1} parent=0 // pred_fallthru
    _
  // Predicated region
  $region14: #{tpu_custom_call.1} parent=0 // pred_check
    _
  $region15: #{tpu_custom_call.1} parent=0 // pred_check_branch
    %18 = sbr.rel (0) target = $region17
  $region16: #{tpu_custom_call.1} parent=0 // pred_region
    _
  $region17: #{tpu_custom_call.1} parent=0 // pred_fallthru
    _
  // Predicated region
  $region18: #{tpu_custom_call.1} parent=0 // pred_check
    _
  $region19: #{tpu_custom_call.1} parent=0 // pred_check_branch
    %20 = sbr.rel (0) target = $region21
  $region20: #{tpu_custom_call.1} parent=0 // pred_region
    _
  $region21: #{tpu_custom_call.1} parent=0 // pred_fallthru
    _
  // Predicated region
  $region22: #{tpu_custom_call.1} parent=0 // pred_check
    _
  $region23: #{tpu_custom_call.1} parent=0 // pred_check_branch
    %22 = sbr.rel (0) target = $region25
  $region24: #{tpu_custom_call.1} parent=0 // pred_region
    _
  $region25: #{tpu_custom_call.1} parent=0 // pred_fallthru
    _
  %v24 = vld [vmem:[%s0] sm:$0xff]
  %v25 = vpack.c.bf16 %v24, %v24
  %v26 = vld [vmem:[%s1] sm:$0xf]
  %v27 = vld [vmem:[%s1 + $0x4] sm:$0xf]
  %v28 = vld [vmem:[%s2] sm:$0x1]
  %v30 = vlaneseq
  %v31 = vshrl.u32 %v30, 7
  %v32 = vsub.s32 0, %v31
  %v33 = vrot.slane %v28, %v32
  %v37 = vunpack.c.l.b16 %v26
  %v38 = vunpack.c.l.b16 %v27
  %v39 = vpack.c.b16 %v38, %v37
  %vm41 = vcmask 130048
  %v43 = vsel %vm41, %v25, 0
  %45 = vmatprep.subr.bf16.mxu0 0
  %46 = vmatpush1.bf16.msra.mxu0 %v39
  %47 = vmatprep.subr.bf16.mxu0 0
  %48 = vmatpush1.bf16.msra.mxu0 0
  %49 = vmatprep.subr.bf16.mxu0 0
  %50 = vmatpush1.bf16.msra.mxu0 0
  %51 = vmatprep.subr.bf16.mxu0 0
  %52 = vmatpush1.bf16.msra.mxu0 0
  %53 = vmatprep.subr.bf16.mxu0 0
  %54 = vmatpush1.bf16.msra.mxu0 0
  %55 = vmatprep.subr.bf16.mxu0 0
  %56 = vmatpush1.bf16.msra.mxu0 0
  %57 = vmatprep.subr.bf16.mxu0 0
  %58 = vmatpush1.bf16.msra.mxu0 0
  %59 = vmatprep.subr.bf16.mxu0 0
  %60 = vmatpush1.bf16.msra.mxu0 0
  %61 = vmatprep.subr.bf16.mxu0 0
  %62 = vmatpush1.bf16.msra.mxu0 0
  %63 = vmatprep.subr.bf16.mxu0 0
  %64 = vmatpush1.bf16.msra.mxu0 0
  %65 = vmatprep.subr.bf16.mxu0 0
  %66 = vmatpush1.bf16.msra.mxu0 0
  %67 = vmatprep.subr.bf16.mxu0 0
  %68 = vmatpush1.bf16.msra.mxu0 0
  %69 = vmatprep.subr.bf16.mxu0 0
  %70 = vmatpush1.bf16.msra.mxu0 0
  %71 = vmatprep.subr.bf16.mxu0 0
  %72 = vmatpush1.bf16.msra.mxu0 0
  %73 = vmatprep.subr.bf16.mxu0 0
  %74 = vmatpush1.bf16.msra.mxu0 0
  %75 = vmatprep.subr.bf16.mxu0 0
  %76 = vmatpush1.bf16.msra.mxu0 0
  %77 = vmatprep.mubr.bf16.mxu0 0
  %78 = vmatmul.mubr.bf16.gmra.mrb[0].mxu0 %v43
  %v79 = vpop.f32.mrb[0].mxu0
  %v80 = vadd.f32 %v33, %v79
  %v81 = vpop.f32.mrb[0].mxu0
  %v82 = vpop.f32.mrb[0].mxu0
  %v83 = vpop.f32.mrb[0].mxu0
  %84 = vdwg.mxu0
  %v85 = vmax.f32 %v80, 0.0
  %v86 = vpack.c.bf16 %v85, %v85
  %v87 = vld [vmem:[%s3] sm:$0xff]
  %v88 = vld [vmem:[%s3 + $0x8] sm:$0xff]
  %v89 = vld [vmem:[%s3 + $0x10] sm:$0xff]
  %v90 = vld [vmem:[%s3 + $0x18] sm:$0xff]
  %v91 = vld [vmem:[%s3 + $0x20] sm:$0xff]
  %v92 = vld [vmem:[%s3 + $0x28] sm:$0xff]
  %v93 = vld [vmem:[%s3 + $0x30] sm:$0xff]
  %v94 = vld [vmem:[%s3 + $0x38] sm:$0xff]
  %v95 = vld [vmem:[%s4] sm:$0xf]
  %v97 = vlaneseq
  %v98 = vshrl.u32 %v97, 7
  %v99 = vsub.s32 0, %v98
  %v100 = vrot.slane %v95, %v99
  %v101 = vlaneseq
  %v102 = vshrl.u32 %v101, 7
  %v103 = vsub.s32 1, %v102
  %v104 = vrot.slane %v95, %v103
  %v105 = vlaneseq
  %v106 = vshrl.u32 %v105, 7
  %v107 = vsub.s32 2, %v106
  %v108 = vrot.slane %v95, %v107
  %v109 = vlaneseq
  %v110 = vshrl.u32 %v109, 7
  %v111 = vsub.s32 3, %v110
  %v112 = vrot.slane %v95, %v111
  %v125 = vunpack.c.l.b16 %v87
  %v126 = vunpack.c.h.b16 %v87
  %v127 = vunpack.c.l.b16 %v88
  %v128 = vunpack.c.h.b16 %v88
  %v129 = vunpack.c.l.b16 %v89
  %v130 = vunpack.c.h.b16 %v89
  %v131 = vunpack.c.l.b16 %v90
  %v132 = vunpack.c.h.b16 %v90
  %v133 = vunpack.c.l.b16 %v91
  %v134 = vunpack.c.h.b16 %v91
  %v135 = vunpack.c.l.b16 %v92
  %v136 = vunpack.c.h.b16 %v92
  %v137 = vunpack.c.l.b16 %v93
  %v138 = vunpack.c.h.b16 %v93
  %v139 = vunpack.c.l.b16 %v94
  %v140 = vunpack.c.h.b16 %v94
  %v141 = vpack.c.b16 %v129, %v125
  %v142 = vpack.c.b16 %v130, %v126
  %v143 = vpack.c.b16 %v131, %v127
  %v144 = vpack.c.b16 %v132, %v128
  %v145 = vpack.c.b16 %v137, %v133
  %v146 = vpack.c.b16 %v138, %v134
  %v147 = vpack.c.b16 %v139, %v135
  %v148 = vpack.c.b16 %v140, %v136
  %vm157 = vcmask 261120
  %v159 = vsel %vm157, %v86, 0
  %161 = vmatprep.subr.bf16.mxu0 %v142
  %162 = vmatpush1.bf16.msra.mxu0 %v141
  %163 = vmatprep.subr.bf16.mxu0 %v146
  %164 = vmatpush1.bf16.msra.mxu0 %v145
  %165 = vmatprep.subr.bf16.mxu0 0
  %166 = vmatpush1.bf16.msra.mxu0 0
  %167 = vmatprep.subr.bf16.mxu0 0
  %168 = vmatpush1.bf16.msra.mxu0 0
  %169 = vmatprep.subr.bf16.mxu0 0
  %170 = vmatpush1.bf16.msra.mxu0 0
  %171 = vmatprep.subr.bf16.mxu0 0
  %172 = vmatpush1.bf16.msra.mxu0 0
  %173 = vmatprep.subr.bf16.mxu0 0
  %174 = vmatpush1.bf16.msra.mxu0 0
  %175 = vmatprep.subr.bf16.mxu0 0
  %176 = vmatpush1.bf16.msra.mxu0 0
  %177 = vmatprep.subr.bf16.mxu0 0
  %178 = vmatpush1.bf16.msra.mxu0 0
  %179 = vmatprep.subr.bf16.mxu0 0
  %180 = vmatpush1.bf16.msra.mxu0 0
  %181 = vmatprep.subr.bf16.mxu0 0
  %182 = vmatpush1.bf16.msra.mxu0 0
  %183 = vmatprep.subr.bf16.mxu0 0
  %184 = vmatpush1.bf16.msra.mxu0 0
  %185 = vmatprep.subr.bf16.mxu0 0
  %186 = vmatpush1.bf16.msra.mxu0 0
  %187 = vmatprep.subr.bf16.mxu0 0
  %188 = vmatpush1.bf16.msra.mxu0 0
  %189 = vmatprep.subr.bf16.mxu0 0
  %190 = vmatpush1.bf16.msra.mxu0 0
  %191 = vmatprep.subr.bf16.mxu0 0
  %192 = vmatpush1.bf16.msra.mxu0 0
  %193 = vmatprep.mubr.bf16.mxu0 0
  %194 = vmatmul.mubr.bf16.gmra.mrb[0].mxu0 %v159
  %v195 = vpop.f32.mrb[0].mxu0
  %v196 = vadd.f32 %v100, %v195
  %v197 = vpop.f32.mrb[0].mxu0
  %v198 = vadd.f32 %v104, %v197
  %v199 = vpop.f32.mrb[0].mxu0
  %v200 = vpop.f32.mrb[0].mxu0
  %201 = vdwg.mxu0
  %202 = vmatprep.subr.bf16.mxu0 %v144
  %203 = vmatpush1.bf16.msra.mxu0 %v143
  %204 = vmatprep.subr.bf16.mxu0 %v148
  %205 = vmatpush1.bf16.msra.mxu0 %v147
  %206 = vmatprep.subr.bf16.mxu0 0
  %207 = vmatpush1.bf16.msra.mxu0 0
  %208 = vmatprep.subr.bf16.mxu0 0
  %209 = vmatpush1.bf16.msra.mxu0 0
  %210 = vmatprep.subr.bf16.mxu0 0
  %211 = vmatpush1.bf16.msra.mxu0 0
  %212 = vmatprep.subr.bf16.mxu0 0
  %213 = vmatpush1.bf16.msra.mxu0 0
  %214 = vmatprep.subr.bf16.mxu0 0
  %215 = vmatpush1.bf16.msra.mxu0 0
  %216 = vmatprep.subr.bf16.mxu0 0
  %217 = vmatpush1.bf16.msra.mxu0 0
  %218 = vmatprep.subr.bf16.mxu0 0
  %219 = vmatpush1.bf16.msra.mxu0 0
  %220 = vmatprep.subr.bf16.mxu0 0
  %221 = vmatpush1.bf16.msra.mxu0 0
  %222 = vmatprep.subr.bf16.mxu0 0
  %223 = vmatpush1.bf16.msra.mxu0 0
  %224 = vmatprep.subr.bf16.mxu0 0
  %225 = vmatpush1.bf16.msra.mxu0 0
  %226 = vmatprep.subr.bf16.mxu0 0
  %227 = vmatpush1.bf16.msra.mxu0 0
  %228 = vmatprep.subr.bf16.mxu0 0
  %229 = vmatpush1.bf16.msra.mxu0 0
  %230 = vmatprep.subr.bf16.mxu0 0
  %231 = vmatpush1.bf16.msra.mxu0 0
  %232 = vmatprep.subr.bf16.mxu0 0
  %233 = vmatpush1.bf16.msra.mxu0 0
  %234 = vmatprep.mubr.bf16.mxu0 0
  %235 = vmatmul.mubr.bf16.gmra.mrb[0].mxu0 %v159
  %v236 = vpop.f32.mrb[0].mxu0
  %v237 = vadd.f32 %v108, %v236
  %v238 = vpop.f32.mrb[0].mxu0
  %v239 = vadd.f32 %v112, %v238
  %v240 = vpop.f32.mrb[0].mxu0
  %v241 = vpop.f32.mrb[0].mxu0
  %242 = vdwg.mxu0
  %243 = vmax.xlane.f32.xlu0 %v196
  %v244 = vpop.xlane.xlu0 %243
  %v245 = vsub.f32 %v196, %v244
  %v246 = vmul.f32 %v245, 1.442695
  %v247 = vpow.pop %v246
  %248 = vadd.xlane.f32.xlu0 %v247
  %v249 = vpop.xlane.xlu0 %248
  %v250 = vrcp.pop %v249
  %v251 = vmul.f32 %v247, %v250
  %v252 = vmax.f32 %v251, 0.001
  %253 = vst [vmem:[#allocation2] sm:$0xff] %v252
  %254 = vmax.xlane.f32.xlu0 %v198
  %v255 = vpop.xlane.xlu0 %254
  %v256 = vsub.f32 %v198, %v255
  %v257 = vmul.f32 %v256, 1.442695
  %v258 = vpow.pop %v257
  %259 = vadd.xlane.f32.xlu0 %v258
  %v260 = vpop.xlane.xlu0 %259
  %v261 = vrcp.pop %v260
  %v262 = vmul.f32 %v258, %v261
  %v263 = vmax.f32 %v262, 0.001
  %264 = vst [vmem:[#allocation2 + $0x8] sm:$0xff] %v263
  %265 = vmax.xlane.f32.xlu0 %v237
  %v266 = vpop.xlane.xlu0 %265
  %v267 = vsub.f32 %v237, %v266
  %v268 = vmul.f32 %v267, 1.442695
  %v269 = vpow.pop %v268
  %270 = vadd.xlane.f32.xlu0 %v269
  %v271 = vpop.xlane.xlu0 %270
  %v272 = vrcp.pop %v271
  %v273 = vmul.f32 %v269, %v272
  %v274 = vmax.f32 %v273, 0.001
  %275 = vst [vmem:[#allocation2 + $0x10] sm:$0xff] %v274
  %276 = vmax.xlane.f32.xlu0 %v239
  %v277 = vpop.xlane.xlu0 %276
  %v278 = vsub.f32 %v239, %v277
  %v279 = vmul.f32 %v278, 1.442695
  %v280 = vpow.pop %v279
  %281 = vadd.xlane.f32.xlu0 %v280
  %v282 = vpop.xlane.xlu0 %281
  %v283 = vrcp.pop %v282
  %v284 = vmul.f32 %v280, %v283
  %v285 = vmax.f32 %v284, 0.001
  %286 = vst [vmem:[#allocation2 + $0x18] sm:$0xff] %v285
  %v287 = vld [vmem:[#allocation2] sm:$0xff]
  %v288 = vld [vmem:[#allocation2 + $0x8] sm:$0xff]
  %v289 = vld [vmem:[#allocation2 + $0x10] sm:$0xff]
  %v290 = vld [vmem:[#allocation2 + $0x18] sm:$0xff]
  %v291 = vld [vmem:[%s5] sm:$0xff]
  %v292 = vld [vmem:[%s5 + $0x8] sm:$0xff]
  %v293 = vld [vmem:[%s5 + $0x10] sm:$0xff]
  %v294 = vld [vmem:[%s5 + $0x18] sm:$0xff]
  %v295 = vld [vmem:[%s5 + $0x20] sm:$0xff]
  %v296 = vld [vmem:[%s5 + $0x28] sm:$0xff]
  %v297 = vld [vmem:[%s5 + $0x30] sm:$0xff]
  %v298 = vld [vmem:[%s5 + $0x38] sm:$0xff]
  %v299 = vld [vmem:[%s5 + $0x40] sm:$0xff]
  %v300 = vld [vmem:[%s5 + $0x48] sm:$0xff]
  %v301 = vld [vmem:[%s5 + $0x50] sm:$0xff]
  %v302 = vld [vmem:[%s5 + $0x58] sm:$0xff]
  %v303 = vld [vmem:[%s5 + $0x60] sm:$0xff]
  %v304 = vld [vmem:[%s5 + $0x68] sm:$0xff]
  %v305 = vld [vmem:[%s5 + $0x70] sm:$0xff]
  %v306 = vld [vmem:[%s5 + $0x78] sm:$0xff]
  %v307 = vld [vmem:[%s5 + $0x80] sm:$0xff]
  %v308 = vld [vmem:[%s5 + $0x88] sm:$0xff]
  %v309 = vld [vmem:[%s5 + $0x90] sm:$0xff]
  %v310 = vld [vmem:[%s5 + $0x98] sm:$0xff]
  %v311 = vld [vmem:[%s5 + $0xa0] sm:$0xff]
  %v312 = vld [vmem:[%s5 + $0xa8] sm:$0xff]
  %v313 = vld [vmem:[%s5 + $0xb0] sm:$0xff]
  %v314 = vld [vmem:[%s5 + $0xb8] sm:$0xff]
  %v315 = vld [vmem:[%s5 + $0xc0] sm:$0xff]
  %v316 = vld [vmem:[%s5 + $0xc8] sm:$0xff]
  %v317 = vld [vmem:[%s5 + $0xd0] sm:$0xff]
  %v318 = vld [vmem:[%s5 + $0xd8] sm:$0xff]
  %v319 = vld [vmem:[%s5 + $0xe0] sm:$0xff]
  %v320 = vld [vmem:[%s5 + $0xe8] sm:$0xff]
  %v321 = vld [vmem:[%s5 + $0xf0] sm:$0xff]
  %v322 = vld [vmem:[%s5 + $0xf8] sm:$0xff]
  %v323 = vld [vmem:[%s5 + $0x100] sm:$0xff]
  %v324 = vld [vmem:[%s5 + $0x108] sm:$0xff]
  %v325 = vld [vmem:[%s5 + $0x110] sm:$0xff]
  %v326 = vld [vmem:[%s5 + $0x118] sm:$0xff]
  %v327 = vld [vmem:[%s5 + $0x120] sm:$0xff]
  %v328 = vld [vmem:[%s5 + $0x128] sm:$0xff]
  %v329 = vld [vmem:[%s5 + $0x130] sm:$0xff]
  %v330 = vld [vmem:[%s5 + $0x138] sm:$0xff]
  %v331 = vld [vmem:[%s5 + $0x140] sm:$0xff]
  %v332 = vld [vmem:[%s5 + $0x148] sm:$0xff]
  %v333 = vld [vmem:[%s5 + $0x150] sm:$0xff]
  %v334 = vld [vmem:[%s5 + $0x158] sm:$0xff]
  %v335 = vld [vmem:[%s5 + $0x160] sm:$0xff]
  %v336 = vld [vmem:[%s5 + $0x168] sm:$0xff]
  %v337 = vld [vmem:[%s5 + $0x170] sm:$0xff]
  %v338 = vld [vmem:[%s5 + $0x178] sm:$0xff]
  %v339 = vld [vmem:[%s5 + $0x180] sm:$0xff]
  %v340 = vld [vmem:[%s5 + $0x188] sm:$0xff]
  %v341 = vld [vmem:[%s5 + $0x190] sm:$0xff]
  %v342 = vld [vmem:[%s5 + $0x198] sm:$0xff]
  %v343 = vld [vmem:[%s5 + $0x1a0] sm:$0xff]
  %v344 = vld [vmem:[%s5 + $0x1a8] sm:$0xff]
  %v345 = vld [vmem:[%s5 + $0x1b0] sm:$0xff]
  %v346 = vld [vmem:[%s5 + $0x1b8] sm:$0xff]
  %v347 = vld [vmem:[%s5 + $0x1c0] sm:$0xff]
  %v348 = vld [vmem:[%s5 + $0x1c8] sm:$0xff]
  %v349 = vld [vmem:[%s5 + $0x1d0] sm:$0xff]
  %v350 = vld [vmem:[%s5 + $0x1d8] sm:$0xff]
  %v351 = vld [vmem:[%s5 + $0x1e0] sm:$0xff]
  %v352 = vld [vmem:[%s5 + $0x1e8] sm:$0xff]
  %v353 = vld [vmem:[%s5 + $0x1f0] sm:$0xff]
  %v354 = vld [vmem:[%s5 + $0x1f8] sm:$0xff]
  %355 = vmatprep.subr.mxu0 0.0
  %356 = vmatpush1.msra.mxu0 %v291
  %357 = vmatprep.subr.mxu0 0.0
  %358 = vmatpush1.msra.mxu0 %v292
  %359 = vmatprep.subr.mxu0 0.0
  %360 = vmatpush1.msra.mxu0 %v293
  %361 = vmatprep.subr.mxu0 0.0
  %362 = vmatpush1.msra.mxu0 %v294
  %363 = vmatprep.subr.mxu0 0.0
  %364 = vmatpush1.msra.mxu0 %v295
  %365 = vmatprep.subr.mxu0 0.0
  %366 = vmatpush1.msra.mxu0 %v296
  %367 = vmatprep.subr.mxu0 0.0
  %368 = vmatpush1.msra.mxu0 %v297
  %369 = vmatprep.subr.mxu0 0.0
  %370 = vmatpush1.msra.mxu0 %v298
  %371 = vmatprep.subr.mxu0 0.0
  %372 = vmatpush1.msra.mxu0 %v299
  %373 = vmatprep.subr.mxu0 0.0
  %374 = vmatpush1.msra.mxu0 %v300
  %375 = vmatprep.subr.mxu0 0.0
  %376 = vmatpush1.msra.mxu0 %v301
  %377 = vmatprep.subr.mxu0 0.0
  %378 = vmatpush1.msra.mxu0 %v302
  %379 = vmatprep.subr.mxu0 0.0
  %380 = vmatpush1.msra.mxu0 %v303
  %381 = vmatprep.subr.mxu0 0.0
  %382 = vmatpush1.msra.mxu0 %v304
  %383 = vmatprep.subr.mxu0 0.0
  %384 = vmatpush1.msra.mxu0 %v305
  %385 = vmatprep.subr.mxu0 0.0
  %386 = vmatpush1.msra.mxu0 %v306
  %387 = vmatprep.subr.mxu0 0.0
  %388 = vmatpush1.msra.mxu0 %v307
  %389 = vmatprep.subr.mxu0 0.0
  %390 = vmatpush1.msra.mxu0 %v308
  %391 = vmatprep.subr.mxu0 0.0
  %392 = vmatpush1.msra.mxu0 %v309
  %393 = vmatprep.subr.mxu0 0.0
  %394 = vmatpush1.msra.mxu0 %v310
  %395 = vmatprep.subr.mxu0 0.0
  %396 = vmatpush1.msra.mxu0 %v311
  %397 = vmatprep.subr.mxu0 0.0
  %398 = vmatpush1.msra.mxu0 %v312
  %399 = vmatprep.subr.mxu0 0.0
  %400 = vmatpush1.msra.mxu0 %v313
  %401 = vmatprep.subr.mxu0 0.0
  %402 = vmatpush1.msra.mxu0 %v314
  %403 = vmatprep.subr.mxu0 0.0
  %404 = vmatpush1.msra.mxu0 %v315
  %405 = vmatprep.subr.mxu0 0.0
  %406 = vmatpush1.msra.mxu0 %v316
  %407 = vmatprep.subr.mxu0 0.0
  %408 = vmatpush1.msra.mxu0 %v317
  %409 = vmatprep.subr.mxu0 0.0
  %410 = vmatpush1.msra.mxu0 %v318
  %411 = vmatprep.subr.mxu0 0.0
  %412 = vmatpush1.msra.mxu0 %v319
  %413 = vmatprep.subr.mxu0 0.0
  %414 = vmatpush1.msra.mxu0 %v320
  %415 = vmatprep.subr.mxu0 0.0
  %416 = vmatpush1.msra.mxu0 %v321
  %417 = vmatprep.subr.mxu0 0.0
  %418 = vmatpush1.msra.mxu0 %v322
  %419 = vmatprep.mubr.f32.mxu0 %v288
  %420 = vmatmul.mubr.f32.gmra.mrb[0].mxu0 %v287
  %v421 = vpop.f32.mrb[0].mxu0
  %v422 = vadd.f32 0.0, %v421
  %v423 = vpop.f32.mrb[0].mxu0
  %424 = vdwg.mxu0
  %425 = vmatprep.subr.mxu0 0.0
  %426 = vmatpush1.msra.mxu0 %v323
  %427 = vmatprep.subr.mxu0 0.0
  %428 = vmatpush1.msra.mxu0 %v324
  %429 = vmatprep.subr.mxu0 0.0
  %430 = vmatpush1.msra.mxu0 %v325
  %431 = vmatprep.subr.mxu0 0.0
  %432 = vmatpush1.msra.mxu0 %v326
  %433 = vmatprep.subr.mxu0 0.0
  %434 = vmatpush1.msra.mxu0 %v327
  %435 = vmatprep.subr.mxu0 0.0
  %436 = vmatpush1.msra.mxu0 %v328
  %437 = vmatprep.subr.mxu0 0.0
  %438 = vmatpush1.msra.mxu0 %v329
  %439 = vmatprep.subr.mxu0 0.0
  %440 = vmatpush1.msra.mxu0 %v330
  %441 = vmatprep.subr.mxu0 0.0
  %442 = vmatpush1.msra.mxu0 %v331
  %443 = vmatprep.subr.mxu0 0.0
  %444 = vmatpush1.msra.mxu0 %v332
  %445 = vmatprep.subr.mxu0 0.0
  %446 = vmatpush1.msra.mxu0 %v333
  %447 = vmatprep.subr.mxu0 0.0
  %448 = vmatpush1.msra.mxu0 %v334
  %449 = vmatprep.subr.mxu0 0.0
  %450 = vmatpush1.msra.mxu0 %v335
  %451 = vmatprep.subr.mxu0 0.0
  %452 = vmatpush1.msra.mxu0 %v336
  %453 = vmatprep.subr.mxu0 0.0
  %454 = vmatpush1.msra.mxu0 %v337
  %455 = vmatprep.subr.mxu0 0.0
  %456 = vmatpush1.msra.mxu0 %v338
  %457 = vmatprep.subr.mxu0 0.0
  %458 = vmatpush1.msra.mxu0 %v339
  %459 = vmatprep.subr.mxu0 0.0
  %460 = vmatpush1.msra.mxu0 %v340
  %461 = vmatprep.subr.mxu0 0.0
  %462 = vmatpush1.msra.mxu0 %v341
  %463 = vmatprep.subr.mxu0 0.0
  %464 = vmatpush1.msra.mxu0 %v342
  %465 = vmatprep.subr.mxu0 0.0
  %466 = vmatpush1.msra.mxu0 %v343
  %467 = vmatprep.subr.mxu0 0.0
  %468 = vmatpush1.msra.mxu0 %v344
  %469 = vmatprep.subr.mxu0 0.0
  %470 = vmatpush1.msra.mxu0 %v345
  %471 = vmatprep.subr.mxu0 0.0
  %472 = vmatpush1.msra.mxu0 %v346
  %473 = vmatprep.subr.mxu0 0.0
  %474 = vmatpush1.msra.mxu0 %v347
  %475 = vmatprep.subr.mxu0 0.0
  %476 = vmatpush1.msra.mxu0 %v348
  %477 = vmatprep.subr.mxu0 0.0
  %478 = vmatpush1.msra.mxu0 %v349
  %479 = vmatprep.subr.mxu0 0.0
  %480 = vmatpush1.msra.mxu0 %v350
  %481 = vmatprep.subr.mxu0 0.0
  %482 = vmatpush1.msra.mxu0 %v351
  %483 = vmatprep.subr.mxu0 0.0
  %484 = vmatpush1.msra.mxu0 %v352
  %485 = vmatprep.subr.mxu0 0.0
  %486 = vmatpush1.msra.mxu0 %v353
  %487 = vmatprep.subr.mxu0 0.0
  %488 = vmatpush1.msra.mxu0 %v354
  %489 = vmatprep.mubr.f32.mxu0 %v290
  %490 = vmatmul.mubr.f32.gmra.mrb[0].mxu0 %v289
  %v491 = vpop.f32.mrb[0].mxu0
  %v492 = vadd.f32 %v422, %v491
  %v493 = vpop.f32.mrb[0].mxu0
  %494 = vdwg.mxu0
  %vm495 = vcmask 31744
  %496 = vst.msk [vmem:[%s6] sm:$0xff] %vm495, %v492
  // Predicated region
  $region26: #{tpu_custom_call.1} parent=0 // pred_check
    _
  $region27: #{tpu_custom_call.1} parent=0 // pred_check_branch
    %498 = sbr.rel (0) target = $region29
  $region28: #{tpu_custom_call.1} parent=0 // pred_region
    _
  $region29: #{tpu_custom_call.1} parent=0 // pred_fallthru
    _
  // Predicated region
  $region30: #{tpu_custom_call.1} parent=0 // pred_check
    _
  $region31: #{tpu_custom_call.1} parent=0 // pred_check_branch
    %500 = sbr.rel (0) target = $region33
  $region32: #{tpu_custom_call.1} parent=0 // pred_region
    _
  $region33: #{tpu_custom_call.1} parent=0 // pred_fallthru
    _

</llo_original>
